<compile_context>
chip_gen: v5e
topology: v5e:2x2
jax: 0.10.0
libtpu: 0.0.40
codegen_flags: <defaults>
</compile_context>

<pallas_src>
import jax
import jax.numpy as jnp
from jax.experimental import pallas as pl
from jax.experimental.pallas import tpu as pltpu

_LANES = 128          # vreg lane width: lane-dense last dim -> unmasked vld/vst
_SUBLANES = 8         # f32 sublane tile
_MAX_TILE_ROWS = 2048  # 2048 * 128 * 4 B = 1 MiB per f32 block; ~4 MiB with
                       # in/out double buffers -> safe on v5e/v6e/v7x VMEM.


def _copy_kernel(x_ref, o_ref):
    # Pure elementwise pass-through on the VPU (mem-bound copy).
    o_ref[...] = x_ref[...]


def _identity_impl(x: jax.Array) -> jax.Array:
    """Lane-dense, row-tiled Pallas identity copy of x."""
    orig_shape = x.shape
    total = x.size

    # Flatten and view as a lane-dense (rows, 128) slab.
    rows = pl.cdiv(total, _LANES)
    rows = ((rows + _SUBLANES - 1) // _SUBLANES) * _SUBLANES  # sublane-align
    tile_rows = min(_MAX_TILE_ROWS, rows)
    grid_rows = pl.cdiv(rows, tile_rows)
    rows_padded = grid_rows * tile_rows
    padded_total = rows_padded * _LANES

    flat = x.reshape(-1)
    if padded_total != total:
        flat = jnp.pad(flat, (0, padded_total - total))
    x2d = flat.reshape(rows_padded, _LANES)

    out2d = pl.pallas_call(
        _copy_kernel,
        out_shape=jax.ShapeDtypeStruct(x2d.shape, x2d.dtype),
        grid=(grid_rows,),
        in_specs=[pl.BlockSpec((tile_rows, _LANES), lambda i: (i, 0))],
        out_specs=pl.BlockSpec((tile_rows, _LANES), lambda i: (i, 0)),
        compiler_params=pltpu.CompilerParams(
            dimension_semantics=("parallel",),  # shards across v7x's 2 TCs
        ),
    )(x2d)

    out_flat = out2d.reshape(-1)
    if padded_total != total:
        out_flat = out_flat[:total]
    return out_flat.reshape(orig_shape)


# Jit so reshapes/pad/slice fuse around the pallas_call and tile sizes are
# resolved statically from the (static) input shape.
equivariant_encoder_identity = jax.jit(_identity_impl)


def equivariant_encoder_forward(x):
    """Exact semantics of EquivariantEncoder.forward.

    The reference body is `pass`: no compute, returns None.  Per the perf
    review, the hot path does no device copy, no block_until_ready, and no
    host-side equality assert (those live in the test harness below only).
    """
    del x
    return None


if __name__ == "__main__":
    key = jax.random.PRNGKey(0)
    # Small NCHW input consistent with a generic encoder: batch=2, channels=4,
    # spatial 16x16.
    x = jax.random.normal(key, (2, 4, 16, 16), dtype=jnp.float32)

    # Exercise the optimized Pallas identity kernel once and validate it
    # (test-only check; not part of the forward hot path).
    y = equivariant_encoder_identity(x)
    jax.block_until_ready(y)
    assert y.shape == x.shape and y.dtype == x.dtype
    assert bool(jnp.array_equal(y, x)), "identity surrogate mismatch"

    # Faithful forward: returns None, like the PyTorch module.
    result = equivariant_encoder_forward(x)
    assert result is None

    print("KERNEL_OK")
</pallas_src>

<mosaic_0001>
module attributes {stable_mosaic.version = 11 : i64} {
  func.func @_copy_kernel(%arg0: i32, %arg1: memref<16x128xf32, #tpu.memory_space<vmem>>, %arg2: memref<16x128xf32, #tpu.memory_space<vmem>>) attributes {dimension_semantics = [#tpu.dimension_semantics<parallel>], iteration_bounds = array<i64: 1>, scalar_prefetch = 0 : i64, scratch_operands = 0 : i64, tpu.core_type = #tpu.core_type<tc>, window_params = [{transform_indices = @transform_0, window_bounds = array<i64: 16, 128>}, {transform_indices = @transform_1, window_bounds = array<i64: 16, 128>}]} {
    %c0 = arith.constant 0 : index
    %c0_0 = arith.constant 0 : index
    %0 = vector.load %arg1[%c0, %c0_0] : memref<16x128xf32, #tpu.memory_space<vmem>>, vector<16x128xf32>
    %c0_1 = arith.constant 0 : index
    %c0_2 = arith.constant 0 : index
    %1 = vector.load %arg2[%c0_1, %c0_2] : memref<16x128xf32, #tpu.memory_space<vmem>>, vector<16x128xf32>
    tpu.vector_store %arg2[%c0_1, %c0_2], %0 {strides = array<i32>} : memref<16x128xf32, #tpu.memory_space<vmem>>, vector<16x128xf32>,
    return
  }
  func.func @transform_0(%arg0: i32) -> (i32, i32) {
    %c0_i32 = arith.constant 0 : i32
    %c0_i32_0 = arith.constant 0 : i32
    return %arg0, %c0_i32 : i32, i32
  }
  func.func @transform_1(%arg0: i32) -> (i32, i32) {
    %c0_i32 = arith.constant 0 : i32
    %c0_i32_0 = arith.constant 0 : i32
    return %arg0, %c0_i32 : i32, i32
  }
}

</mosaic_0001>

<llo_original>
// kernel: _identity_impl.1
$region0: #{_identity_impl.1}
  #allocation0 [shape = 'u32[]', space=smem, size = 0x4, offset = 0x4, fixed_abs, tag = 'smem constant byte address 0x4 - core index']
  #allocation1 [shape = 'u32[72,128]{1,0:T(1,128)}', space=vmem, size = 0x9000, scoped, tag = 'internal scratch']
  %s0 = inlined_call_operand.vmem [shape: f32[16,128], index: 0, kind: input, shape index: {}]
  %s1 = inlined_call_operand.vmem [shape: f32[16,128], index: 1, kind: output, shape index: {}]
  %s2 = sld [smem:[#allocation0]]
  $region14: #{_identity_impl.1} parent=0
    _
  %s4 = ssub.s32 1, %s2
  %s5 = scalar_select 0, %s4, %s2
  // Predicated region
  $region2: #{_identity_impl.1} parent=0 // pred_check
    _
  $region3: #{_identity_impl.1} parent=0 // pred_check_branch
    %7 = sbr.rel (0) target = $region5
  $region4: #{_identity_impl.1} parent=0 // pred_region
    _
  $region5: #{_identity_impl.1} parent=0 // pred_fallthru
    _
  %v8 = vld [vmem:[%s0] sm:$0xff]
  %v9 = vld [vmem:[%s0 + $0x8] sm:$0xff]
  %10 = vst [vmem:[%s1] sm:$0xff] %v8
  %11 = vst [vmem:[%s1 + $0x8] sm:$0xff] %v9
  // Predicated region
  $region6: #{_identity_impl.1} parent=0 // pred_check
    _
  $region7: #{_identity_impl.1} parent=0 // pred_check_branch
    %13 = sbr.rel (0) target = $region9
  $region8: #{_identity_impl.1} parent=0 // pred_region
    _
  $region9: #{_identity_impl.1} parent=0 // pred_fallthru
    _
  // Predicated region
  $region10: #{_identity_impl.1} parent=0 // pred_check
    _
  $region11: #{_identity_impl.1} parent=0 // pred_check_branch
    %15 = sbr.rel (0) target = $region13
  $region12: #{_identity_impl.1} parent=0 // pred_region
    _
  $region13: #{_identity_impl.1} parent=0 // pred_fallthru
    _

</llo_original>
